<compile_context>
chip_gen: v6e
topology: v6e:2x2x1
jax: 0.10.0
libtpu: 0.0.40
codegen_flags: <defaults>
</compile_context>

<pallas_src>
import functools

import jax
import jax.numpy as jnp
from jax.experimental import pallas as pl
from jax.experimental.pallas import tpu as pltpu

RED_DIM = 48
HIDDEN = 70
OUT = 5
CLS_PAD = 8            # classes padded to one sublane tile; pad rows masked via ~-inf bias
NEG_INF = -1e30        # exp(pad_logit - max) underflows to exactly 0


def _cdiv(a, b):
    return (a + b - 1) // b


def _round_up(n, m):
    return _cdiv(n, m) * m


def mlffn_kernel(x_ref, w1_ref, b1_ref, w2t_ref, b2t_ref, o_ref):
    # One batch tile per grid step; weight/bias blocks use index_map (0,0) every step
    # so they stay VMEM-resident while x tiles are streamed (prefetch i+1 / compute i).
    x = x_ref[...].astype(jnp.bfloat16)                               # cast in-kernel (no extra HBM pass)
    h = jnp.dot(x, w1_ref[...], preferred_element_type=jnp.float32)   # (TB, 70): MXU bf16 in, f32 acc
    h = jnp.maximum(h + b1_ref[...], 0.0)                             # bias + ReLU (f32, VPU)

    # Layer 2 + softmax in transposed orientation: contract the hidden (last) dim of
    # both operands -> logits_T (CLS_PAD, TB): classes on sublanes, batch on lanes.
    # NOTE: second matmul kept f32 for numerical fidelity (negligible cost, mem-bound).
    logits_t = jax.lax.dot_general(
        w2t_ref[...], h,
        dimension_numbers=(((1,), (1,)), ((), ())),
        preferred_element_type=jnp.float32) + b2t_ref[...]            # (8, TB)

    # Numerically stable softmax over the 8-sublane class axis.  Pad rows carry a
    # ~-inf bias so exp() there is exactly 0 and they never affect max / sum.
    m = jnp.max(logits_t, axis=0, keepdims=True)                      # (1, TB)
    e = jnp.exp(logits_t - m)
    s = jnp.sum(e, axis=0, keepdims=True)
    o_ref[...] = (e / s).astype(o_ref.dtype)                          # exact divide: rows sum to 1


def _choose_tile(batch, block_b, min_tiles=4):
    """Batch tile: multiple of 128 (lane-dense (8, tb) output block), at least
    `min_tiles` grid steps when batch allows (v7x dual-TC sharding + pipelining),
    and sized to minimize batch padding."""
    n_tiles = max(min_tiles, _cdiv(batch, block_b))
    tb = max(128, _round_up(_cdiv(batch, n_tiles), 128))
    tb = min(tb, _round_up(block_b, 128))
    bp = _round_up(batch, tb)
    return tb, bp


@functools.partial(jax.jit, static_argnames=("block_b",))
def mlffn_forward(x, w1, b1, w2, b2, *, block_b=8192):
    """x: (B, 48) f32; w1: (48, 70); b1: (70,); w2: (70, 5); b2: (5,). Returns (B, 5) f32."""
    B = x.shape[0]
    tb, bp = _choose_tile(B, block_b)
    if bp != B:
        x = jnp.pad(x, ((0, bp - B), (0, 0)))

    w1_in = w1.astype(jnp.bfloat16)                    # (48, 70) resident, tiny
    b1_in = b1.reshape(1, HIDDEN).astype(jnp.float32)  # (1, 70)

    # Layer 2 stored transposed and sublane-padded to 8 classes: zero weights + ~-inf
    # bias on pad rows so softmax over 8 rows == softmax over the real 5 classes.
    w2t_in = jnp.zeros((CLS_PAD, HIDDEN), jnp.float32).at[:OUT, :].set(
        w2.astype(jnp.float32).T)
    b2t_in = (jnp.full((CLS_PAD, 1), NEG_INF, jnp.float32)
              .at[:OUT, 0].set(b2.astype(jnp.float32)))

    grid = (bp // tb,)
    cost = pl.CostEstimate(
        flops=2 * bp * (RED_DIM * HIDDEN + HIDDEN * CLS_PAD),
        transcendentals=bp * CLS_PAD,
        bytes_accessed=(x.size * 4 + w1_in.size * 2
                        + (b1_in.size + w2t_in.size + b2t_in.size) * 4
                        + CLS_PAD * bp * 4),
    )

    out_t = pl.pallas_call(
        mlffn_kernel,
        out_shape=jax.ShapeDtypeStruct((CLS_PAD, bp), jnp.float32),
        grid_spec=pltpu.PrefetchScalarGridSpec(
            num_scalar_prefetch=0,
            grid=grid,
            in_specs=[
                pl.BlockSpec((tb, RED_DIM), lambda i: (i, 0)),        # x tile: streamed / pipelined
                pl.BlockSpec((RED_DIM, HIDDEN), lambda i: (0, 0)),    # w1: VMEM-resident
                pl.BlockSpec((1, HIDDEN), lambda i: (0, 0)),          # b1: VMEM-resident
                pl.BlockSpec((CLS_PAD, HIDDEN), lambda i: (0, 0)),    # w2^T (sublane-padded): resident
                pl.BlockSpec((CLS_PAD, 1), lambda i: (0, 0)),         # b2^T (sublane-padded): resident
            ],
            out_specs=pl.BlockSpec((CLS_PAD, tb), lambda i: (0, i)),  # compact lane-dense store
        ),
        compiler_params=pltpu.CompilerParams(
            dimension_semantics=("parallel",),          # shard batch tiles across v7x's 2 TCs
            vmem_limit_bytes=48 * 1024 * 1024,          # fits tb=8192 with headroom on v5e/v6e/v7x
        ),
        cost_estimate=cost,
    )(x, w1_in, b1_in, w2t_in, b2t_in)

    # Slice off class/batch padding and return the conventional (B, 5) layout.
    # This touches only the compact (8, bp) slab (~32 B/row), not a (bp, 128) one.
    return out_t[:OUT, :B].T


def init_params(key):
    # Deterministic init mimicking PyTorch Linear default (uniform +/- 1/sqrt(fan_in)).
    k1, k2, k3, k4 = jax.random.split(key, 4)
    bound1 = 1.0 / jnp.sqrt(RED_DIM)
    bound2 = 1.0 / jnp.sqrt(HIDDEN)
    w1 = jax.random.uniform(k1, (RED_DIM, HIDDEN), jnp.float32, -bound1, bound1)
    b1 = jax.random.uniform(k2, (HIDDEN,), jnp.float32, -bound1, bound1)
    w2 = jax.random.uniform(k3, (HIDDEN, OUT), jnp.float32, -bound2, bound2)
    b2 = jax.random.uniform(k4, (OUT,), jnp.float32, -bound2, bound2)
    return w1, b1, w2, b2


def reference_forward(x, w1, b1, w2, b2):
    # Pure f32 reference of the PyTorch module's forward.
    h = jnp.maximum(x @ w1 + b1.reshape(1, -1), 0.0)
    logits = h @ w2 + b2.reshape(1, -1)
    return jax.nn.softmax(logits, axis=1)


if __name__ == "__main__":
    key = jax.random.PRNGKey(0)
    kx, kp = jax.random.split(key)

    batch = 8
    x = jax.random.normal(kx, (batch, RED_DIM), jnp.float32)
    w1, b1, w2, b2 = init_params(kp)

    out = mlffn_forward(x, w1, b1, w2, b2)
    out = jax.block_until_ready(out)

    ref = reference_forward(x, w1, b1, w2, b2)
    assert out.shape == (batch, OUT)
    # Layer-1 inputs fed to the MXU in bf16 -> compare against the f32 reference at
    # bf16-appropriate tolerance (deliberate, documented numerics change).
    assert bool(jnp.allclose(out, ref, atol=2e-2, rtol=2e-2)), "mismatch vs f32 reference"
    # Exact f32 division in the kernel -> rows sum to 1 to f32 precision.
    assert bool(jnp.allclose(jnp.sum(out, axis=1), 1.0, atol=1e-3)), "softmax rows must sum to 1"

    print("KERNEL_OK")
</pallas_src>

<mosaic_0001>
module attributes {stable_mosaic.version = 11 : i64} {
  func.func @mlffn_kernel(%arg0: i32, %arg1: memref<128x48xf32, #tpu.memory_space<vmem>>, %arg2: memref<48x70xbf16, #tpu.memory_space<vmem>>, %arg3: memref<1x70xf32, #tpu.memory_space<vmem>>, %arg4: memref<8x70xf32, #tpu.memory_space<vmem>>, %arg5: memref<8x1xf32, #tpu.memory_space<vmem>>, %arg6: memref<8x128xf32, #tpu.memory_space<vmem>>) attributes {dimension_semantics = [#tpu.dimension_semantics<parallel>], iteration_bounds = array<i64: 1>, scalar_prefetch = 0 : i64, scratch_operands = 0 : i64, tpu.core_type = #tpu.core_type<tc>, window_params = [{transform_indices = @transform_0, window_bounds = array<i64: 128, 48>}, {pipeline_mode = #tpu.pipeline_mode<synchronous>, transform_indices = @transform_1, window_bounds = array<i64: 48, 70>}, {pipeline_mode = #tpu.pipeline_mode<synchronous>, transform_indices = @transform_2, window_bounds = array<i64: 1, 70>}, {pipeline_mode = #tpu.pipeline_mode<synchronous>, transform_indices = @transform_3, window_bounds = array<i64: 8, 70>}, {pipeline_mode = #tpu.pipeline_mode<synchronous>, transform_indices = @transform_4, window_bounds = array<i64: 8, 1>}, {transform_indices = @transform_5, window_bounds = array<i64: 8, 128>}]} {
    %c0 = arith.constant 0 : index
    %c0_0 = arith.constant 0 : index
    %0 = vector.load %arg1[%c0, %c0_0] : memref<128x48xf32, #tpu.memory_space<vmem>>, vector<128x48xf32>
    %1 = arith.truncf %0 : vector<128x48xf32> to vector<128x48xbf16>
    %c0_1 = arith.constant 0 : index
    %c0_2 = arith.constant 0 : index
    %2 = vector.load %arg2[%c0_1, %c0_2] : memref<48x70xbf16, #tpu.memory_space<vmem>>, vector<48x70xbf16>
    %cst = arith.constant dense<0.000000e+00> : vector<128x70xf32>
    %3 = tpu.matmul %1, %2, %cst {dimension_numbers = #tpu.dot_dimension_numbers<[1], [0], [0], [1], [0, 0, 1, 1], [], []>} : vector<128x48xbf16>, vector<48x70xbf16>, vector<128x70xf32> -> vector<128x70xf32>
    %c0_3 = arith.constant 0 : index
    %c0_4 = arith.constant 0 : index
    %4 = vector.load %arg3[%c0_3, %c0_4] : memref<1x70xf32, #tpu.memory_space<vmem>>, vector<1x70xf32>
    %5 = vector.broadcast %4 : vector<1x70xf32> to vector<128x70xf32>
    %6 = arith.addf %3, %5 : vector<128x70xf32>
    %cst_5 = arith.constant 0.000000e+00 : f32
    %7 = vector.broadcast %cst_5 : f32 to vector<128x70xf32>
    %8 = arith.maximumf %6, %7 : vector<128x70xf32>
    %c0_6 = arith.constant 0 : index
    %c0_7 = arith.constant 0 : index
    %9 = vector.load %arg4[%c0_6, %c0_7] : memref<8x70xf32, #tpu.memory_space<vmem>>, vector<8x70xf32>
    %cst_8 = arith.constant dense<0.000000e+00> : vector<8x128xf32>
    %10 = tpu.matmul %9, %8, %cst_8 {dimension_numbers = #tpu.dot_dimension_numbers<[1], [1], [0], [0], [0, 0, 1, 0], [], []>} : vector<8x70xf32>, vector<128x70xf32>, vector<8x128xf32> -> vector<8x128xf32>
    %c0_9 = arith.constant 0 : index
    %c0_10 = arith.constant 0 : index
    %11 = vector.load %arg5[%c0_9, %c0_10] : memref<8x1xf32, #tpu.memory_space<vmem>>, vector<8x1xf32>
    %12 = vector.broadcast %11 : vector<8x1xf32> to vector<8x128xf32>
    %13 = arith.addf %10, %12 : vector<8x128xf32>
    %cst_11 = arith.constant dense<0xFF800000> : vector<128xf32>
    %14 = vector.multi_reduction <maximumf>, %13, %cst_11 [0] : vector<8x128xf32> to vector<128xf32>
    %15 = vector.shape_cast %14 : vector<128xf32> to vector<1x128xf32>
    %16 = vector.broadcast %15 : vector<1x128xf32> to vector<8x128xf32>
    %17 = arith.subf %13, %16 : vector<8x128xf32>
    %18 = math.exp %17 : vector<8x128xf32>
    %cst_12 = arith.constant dense<0.000000e+00> : vector<128xf32>
    %19 = vector.multi_reduction <add>, %18, %cst_12 [0] : vector<8x128xf32> to vector<128xf32>
    %20 = vector.shape_cast %19 : vector<128xf32> to vector<1x128xf32>
    %21 = vector.broadcast %20 : vector<1x128xf32> to vector<8x128xf32>
    %22 = arith.divf %18, %21 : vector<8x128xf32>
    %c0_13 = arith.constant 0 : index
    %c0_14 = arith.constant 0 : index
    %23 = vector.load %arg6[%c0_13, %c0_14] : memref<8x128xf32, #tpu.memory_space<vmem>>, vector<8x128xf32>
    tpu.vector_store %arg6[%c0_13, %c0_14], %22 {strides = array<i32>} : memref<8x128xf32, #tpu.memory_space<vmem>>, vector<8x128xf32>,
    return
  }
  func.func @transform_0(%arg0: i32) -> (i32, i32) {
    %c0_i32 = arith.constant 0 : i32
    %c0_i32_0 = arith.constant 0 : i32
    return %arg0, %c0_i32 : i32, i32
  }
  func.func @transform_1(%arg0: i32) -> (i32, i32) {
    %c0_i32 = arith.constant 0 : i32
    %c0_i32_0 = arith.constant 0 : i32
    %c0_i32_1 = arith.constant 0 : i32
    return %c0_i32, %c0_i32_0 : i32, i32
  }
  func.func @transform_2(%arg0: i32) -> (i32, i32) {
    %c0_i32 = arith.constant 0 : i32
    %c0_i32_0 = arith.constant 0 : i32
    %c0_i32_1 = arith.constant 0 : i32
    return %c0_i32, %c0_i32_0 : i32, i32
  }
  func.func @transform_3(%arg0: i32) -> (i32, i32) {
    %c0_i32 = arith.constant 0 : i32
    %c0_i32_0 = arith.constant 0 : i32
    %c0_i32_1 = arith.constant 0 : i32
    return %c0_i32, %c0_i32_0 : i32, i32
  }
  func.func @transform_4(%arg0: i32) -> (i32, i32) {
    %c0_i32 = arith.constant 0 : i32
    %c0_i32_0 = arith.constant 0 : i32
    %c0_i32_1 = arith.constant 0 : i32
    return %c0_i32, %c0_i32_0 : i32, i32
  }
  func.func @transform_5(%arg0: i32) -> (i32, i32) {
    %c0_i32 = arith.constant 0 : i32
    %c0_i32_0 = arith.constant 0 : i32
    return %c0_i32, %arg0 : i32, i32
  }
}

</mosaic_0001>

<llo_original>
// kernel: mlffn_forward.1
$region0: #{mlffn_forward.1}
  #allocation0 [shape = 'u32[]', space=smem, size = 0x4, offset = 0x4, fixed_abs, tag = 'smem constant byte address 0x4 - core index']
  #allocation1 [shape = 'u32[144,128]{1,0:T(1,128)}', space=vmem, size = 0x12000, scoped, tag = 'internal scratch']
  %s0 = inlined_call_operand.vmem [shape: f32[128,48], index: 0, kind: input, shape index: {}]
  %s1 = inlined_call_operand.vmem [shape: bf16[48,70], index: 1, kind: input, shape index: {}]
  %s2 = inlined_call_operand.vmem [shape: f32[1,70], index: 2, kind: input, shape index: {}]
  %s3 = inlined_call_operand.vmem [shape: f32[8,70], index: 3, kind: input, shape index: {}]
  %s4 = inlined_call_operand.vmem [shape: f32[8,1], index: 4, kind: input, shape index: {}]
  %s5 = inlined_call_operand.vmem [shape: f32[8,128], index: 5, kind: output, shape index: {}]
  %s6 = sld [smem:[#allocation0]]
  $region30: #{mlffn_forward.1} parent=0
    _
  %s8 = ssub.s32 1, %s6
  %s9 = scalar_select 0, %s8, %s6
  // Predicated region
  $region2: #{mlffn_forward.1} parent=0 // pred_check
    _
  $region3: #{mlffn_forward.1} parent=0 // pred_check_branch
    %11 = sbr.rel (0) target = $region5
  $region4: #{mlffn_forward.1} parent=0 // pred_region
    _
  $region5: #{mlffn_forward.1} parent=0 // pred_fallthru
    _
  // Predicated region
  $region6: #{mlffn_forward.1} parent=0 // pred_check
    _
  $region7: #{mlffn_forward.1} parent=0 // pred_check_branch
    %13 = sbr.rel (0) target = $region9
  $region8: #{mlffn_forward.1} parent=0 // pred_region
    _
  $region9: #{mlffn_forward.1} parent=0 // pred_fallthru
    _
  // Predicated region
  $region10: #{mlffn_forward.1} parent=0 // pred_check
    _
  $region11: #{mlffn_forward.1} parent=0 // pred_check_branch
    %15 = sbr.rel (0) target = $region13
  $region12: #{mlffn_forward.1} parent=0 // pred_region
    _
  $region13: #{mlffn_forward.1} parent=0 // pred_fallthru
    _
  // Predicated region
  $region14: #{mlffn_forward.1} parent=0 // pred_check
    _
  $region15: #{mlffn_forward.1} parent=0 // pred_check_branch
    %17 = sbr.rel (0) target = $region17
  $region16: #{mlffn_forward.1} parent=0 // pred_region
    _
  $region17: #{mlffn_forward.1} parent=0 // pred_fallthru
    _
  // Predicated region
  $region18: #{mlffn_forward.1} parent=0 // pred_check
    _
  $region19: #{mlffn_forward.1} parent=0 // pred_check_branch
    %19 = sbr.rel (0) target = $region21
  $region20: #{mlffn_forward.1} parent=0 // pred_region
    _
  $region21: #{mlffn_forward.1} parent=0 // pred_fallthru
    _
  %v21 = vld [vmem:[%s0] sm:$0xff]
  %v22 = vld [vmem:[%s0 + $0x8] sm:$0xff]
  %v23 = vld [vmem:[%s0 + $0x10] sm:$0xff]
  %v24 = vld [vmem:[%s0 + $0x18] sm:$0xff]
  %v25 = vld [vmem:[%s0 + $0x20] sm:$0xff]
  %v26 = vld [vmem:[%s0 + $0x28] sm:$0xff]
  %v27 = vld [vmem:[%s0 + $0x30] sm:$0xff]
  %v28 = vld [vmem:[%s0 + $0x38] sm:$0xff]
  %v29 = vld [vmem:[%s0 + $0x40] sm:$0xff]
  %v30 = vld [vmem:[%s0 + $0x48] sm:$0xff]
  %v31 = vld [vmem:[%s0 + $0x50] sm:$0xff]
  %v32 = vld [vmem:[%s0 + $0x58] sm:$0xff]
  %v33 = vld [vmem:[%s0 + $0x60] sm:$0xff]
  %v34 = vld [vmem:[%s0 + $0x68] sm:$0xff]
  %v35 = vld [vmem:[%s0 + $0x70] sm:$0xff]
  %v36 = vld [vmem:[%s0 + $0x78] sm:$0xff]
  %v37 = vpack.c.bf16 %v22, %v21
  %v38 = vpack.c.bf16 %v24, %v23
  %v39 = vpack.c.bf16 %v26, %v25
  %v40 = vpack.c.bf16 %v28, %v27
  %v41 = vpack.c.bf16 %v30, %v29
  %v42 = vpack.c.bf16 %v32, %v31
  %v43 = vpack.c.bf16 %v34, %v33
  %v44 = vpack.c.bf16 %v36, %v35
  %v45 = vld [vmem:[%s1] sm:$0xf]
  %v46 = vld [vmem:[%s1 + $0x4] sm:$0xf]
  %v47 = vld [vmem:[%s1 + $0x8] sm:$0xf]
  %v48 = vld [vmem:[%s1 + $0xc] sm:$0xf]
  %v49 = vld [vmem:[%s1 + $0x10] sm:$0xf]
  %v50 = vld [vmem:[%s1 + $0x14] sm:$0xf]
  %v51 = vld [vmem:[%s2] sm:$0x1]
  %v53 = vlaneseq
  %v54 = vshrl.u32 %v53, 7
  %v55 = vsub.s32 0, %v54
  %v56 = vrot.slane %v51, %v55
  %v64 = vunpack.c.l.b16 %v45
  %v65 = vunpack.c.l.b16 %v46
  %v66 = vunpack.c.l.b16 %v47
  %v67 = vunpack.c.l.b16 %v48
  %v68 = vunpack.c.l.b16 %v49
  %v69 = vunpack.c.l.b16 %v50
  %v70 = vpack.c.b16 %v65, %v64
  %v71 = vpack.c.b16 %v67, %v66
  %v72 = vpack.c.b16 %v69, %v68
  %vm76 = vcmask 392192
  %v78 = vsel %vm76, %v37, 0
  %v81 = vsel %vm76, %v38, 0
  %v84 = vsel %vm76, %v39, 0
  %v87 = vsel %vm76, %v40, 0
  %v90 = vsel %vm76, %v41, 0
  %v93 = vsel %vm76, %v42, 0
  %v96 = vsel %vm76, %v43, 0
  %v99 = vsel %vm76, %v44, 0
  %101 = vmatprep.subr.bf16.mxu0 0
  %102 = vmatpush1.bf16.msra.mxu0 0
  %103 = vmatprep.subr.bf16.mxu0 0
  %104 = vmatpush1.bf16.msra.mxu0 0
  %105 = vmatprep.subr.bf16.mxu0 0
  %106 = vmatpush1.bf16.msra.mxu0 0
  %107 = vmatprep.subr.bf16.mxu0 0
  %108 = vmatpush1.bf16.msra.mxu0 0
  %109 = vmatprep.subr.bf16.mxu0 0
  %110 = vmatpush1.bf16.msra.mxu0 0
  %111 = vmatprep.subr.bf16.mxu0 0
  %112 = vmatpush1.bf16.msra.mxu0 %v72
  %113 = vmatprep.subr.bf16.mxu0 0
  %114 = vmatpush1.bf16.msra.mxu0 %v71
  %115 = vmatprep.subr.bf16.mxu0 0
  %116 = vmatpush1.bf16.msra.mxu0 %v70
  %117 = vmatprep.subr.bf16.mxu0 0
  %118 = vmatpush2.bf16.msra.mxu0 0
  %119 = vmatprep.subr.bf16.mxu0 0
  %120 = vmatpush2.bf16.msra.mxu0 0
  %121 = vmatprep.subr.bf16.mxu0 0
  %122 = vmatpush2.bf16.msra.mxu0 0
  %123 = vmatprep.subr.bf16.mxu0 0
  %124 = vmatpush2.bf16.msra.mxu0 0
  %125 = vmatprep.subr.bf16.mxu0 0
  %126 = vmatpush2.bf16.msra.mxu0 0
  %127 = vmatprep.subr.bf16.mxu0 0
  %128 = vmatpush2.bf16.msra.mxu0 0
  %129 = vmatprep.subr.bf16.mxu0 0
  %130 = vmatpush2.bf16.msra.mxu0 0
  %131 = vmatprep.subr.bf16.mxu0 0
  %132 = vmatpush2.bf16.msra.mxu0 0
  %133 = vmatprep.mubr.bf16.mxu0 0
  %134 = vmatmul.mubr.bf16.gmra.mxu0 %v78
  %v135 = vpop.f32.mrf.mxu0
  %v136 = vadd.f32 %v56, %v135
  %v137 = vpop.f32.mrf.mxu0
  %v138 = vpop.f32.mrf.mxu0
  %v139 = vadd.f32 %v56, %v138
  %v140 = vpop.f32.mrf.mxu0
  %141 = vmatprep.mubr.bf16.mxu0 0
  %142 = vmatmul.mubr.bf16.gmra.mxu0 %v81
  %v143 = vpop.f32.mrf.mxu0
  %v144 = vadd.f32 %v56, %v143
  %v145 = vpop.f32.mrf.mxu0
  %v146 = vpop.f32.mrf.mxu0
  %v147 = vadd.f32 %v56, %v146
  %v148 = vpop.f32.mrf.mxu0
  %149 = vmatprep.mubr.bf16.mxu0 0
  %150 = vmatmul.mubr.bf16.gmra.mxu0 %v84
  %v151 = vpop.f32.mrf.mxu0
  %v152 = vadd.f32 %v56, %v151
  %v153 = vpop.f32.mrf.mxu0
  %v154 = vpop.f32.mrf.mxu0
  %v155 = vadd.f32 %v56, %v154
  %v156 = vpop.f32.mrf.mxu0
  %157 = vmatprep.mubr.bf16.mxu0 0
  %158 = vmatmul.mubr.bf16.gmra.mxu0 %v87
  %v159 = vpop.f32.mrf.mxu0
  %v160 = vadd.f32 %v56, %v159
  %v161 = vpop.f32.mrf.mxu0
  %v162 = vpop.f32.mrf.mxu0
  %v163 = vadd.f32 %v56, %v162
  %v164 = vpop.f32.mrf.mxu0
  %165 = vmatprep.mubr.bf16.mxu0 0
  %166 = vmatmul.mubr.bf16.gmra.mxu0 %v90
  %v167 = vpop.f32.mrf.mxu0
  %v168 = vadd.f32 %v56, %v167
  %v169 = vpop.f32.mrf.mxu0
  %v170 = vpop.f32.mrf.mxu0
  %v171 = vadd.f32 %v56, %v170
  %v172 = vpop.f32.mrf.mxu0
  %173 = vmatprep.mubr.bf16.mxu0 0
  %174 = vmatmul.mubr.bf16.gmra.mxu0 %v93
  %v175 = vpop.f32.mrf.mxu0
  %v176 = vadd.f32 %v56, %v175
  %v177 = vpop.f32.mrf.mxu0
  %v178 = vpop.f32.mrf.mxu0
  %v179 = vadd.f32 %v56, %v178
  %v180 = vpop.f32.mrf.mxu0
  %181 = vmatprep.mubr.bf16.mxu0 0
  %182 = vmatmul.mubr.bf16.gmra.mxu0 %v96
  %v183 = vpop.f32.mrf.mxu0
  %v184 = vadd.f32 %v56, %v183
  %v185 = vpop.f32.mrf.mxu0
  %v186 = vpop.f32.mrf.mxu0
  %v187 = vadd.f32 %v56, %v186
  %v188 = vpop.f32.mrf.mxu0
  %189 = vmatprep.mubr.bf16.mxu0 0
  %190 = vmatmul.mubr.bf16.gmra.mxu0 %v99
  %v191 = vpop.f32.mrf.mxu0
  %v192 = vadd.f32 %v56, %v191
  %v193 = vpop.f32.mrf.mxu0
  %v194 = vpop.f32.mrf.mxu0
  %v195 = vadd.f32 %v56, %v194
  %v196 = vpop.f32.mrf.mxu0
  %197 = vdwg.mxu0
  %v198 = vmax.f32 %v136, 0.0
  %v199 = vmax.f32 %v139, 0.0
  %v200 = vmax.f32 %v144, 0.0
  %v201 = vmax.f32 %v147, 0.0
  %v202 = vmax.f32 %v152, 0.0
  %v203 = vmax.f32 %v155, 0.0
  %v204 = vmax.f32 %v160, 0.0
  %v205 = vmax.f32 %v163, 0.0
  %v206 = vmax.f32 %v168, 0.0
  %v207 = vmax.f32 %v171, 0.0
  %v208 = vmax.f32 %v176, 0.0
  %v209 = vmax.f32 %v179, 0.0
  %v210 = vmax.f32 %v184, 0.0
  %v211 = vmax.f32 %v187, 0.0
  %v212 = vmax.f32 %v192, 0.0
  %v213 = vmax.f32 %v195, 0.0
  %v214 = vld [vmem:[%s3] sm:$0xff]
  %v215 = vld [vmem:[%s4] sm:$0xff]
  %217 = vset.pattern.permute.xlu0 0
  %218 = vperm.xlu0 %217, %v215
  %v219 = vpop.permute.xlu0 %218
  %vm221 = vcmask 572416
  %v223 = vsel %vm221, %v214, 0
  %v226 = vsel %vm221, %v198, 0
  %v229 = vsel %vm221, %v199, 0
  %v232 = vsel %vm221, %v200, 0
  %v235 = vsel %vm221, %v201, 0
  %v238 = vsel %vm221, %v202, 0
  %v241 = vsel %vm221, %v203, 0
  %v244 = vsel %vm221, %v204, 0
  %v247 = vsel %vm221, %v205, 0
  %v250 = vsel %vm221, %v206, 0
  %v253 = vsel %vm221, %v207, 0
  %v256 = vsel %vm221, %v208, 0
  %v259 = vsel %vm221, %v209, 0
  %v262 = vsel %vm221, %v210, 0
  %v265 = vsel %vm221, %v211, 0
  %v268 = vsel %vm221, %v212, 0
  %v271 = vsel %vm221, %v213, 0
  %273 = vmatprep.subr.mxu0 0.0
  %274 = vmatpush1.xpose.msra.mxu0 %v271
  %275 = vmatprep.subr.mxu0 0.0
  %276 = vmatpush1.xpose.msra.mxu0 %v268
  %277 = vmatprep.subr.mxu0 0.0
  %278 = vmatpush1.xpose.msra.mxu0 %v265
  %279 = vmatprep.subr.mxu0 0.0
  %280 = vmatpush1.xpose.msra.mxu0 %v262
  %281 = vmatprep.subr.mxu0 0.0
  %282 = vmatpush1.xpose.msra.mxu0 %v259
  %283 = vmatprep.subr.mxu0 0.0
  %284 = vmatpush1.xpose.msra.mxu0 %v256
  %285 = vmatprep.subr.mxu0 0.0
  %286 = vmatpush1.xpose.msra.mxu0 %v253
  %287 = vmatprep.subr.mxu0 0.0
  %288 = vmatpush1.xpose.msra.mxu0 %v250
  %289 = vmatprep.subr.mxu0 0.0
  %290 = vmatpush1.xpose.msra.mxu0 %v247
  %291 = vmatprep.subr.mxu0 0.0
  %292 = vmatpush1.xpose.msra.mxu0 %v244
  %293 = vmatprep.subr.mxu0 0.0
  %294 = vmatpush1.xpose.msra.mxu0 %v241
  %295 = vmatprep.subr.mxu0 0.0
  %296 = vmatpush1.xpose.msra.mxu0 %v238
  %297 = vmatprep.subr.mxu0 0.0
  %298 = vmatpush1.xpose.msra.mxu0 %v235
  %299 = vmatprep.subr.mxu0 0.0
  %300 = vmatpush1.xpose.msra.mxu0 %v232
  %301 = vmatprep.subr.mxu0 0.0
  %302 = vmatpush1.xpose.msra.mxu0 %v229
  %303 = vmatprep.subr.mxu0 0.0
  %304 = vmatpush1.xpose.msra.mxu0 %v226
  %305 = vmatprep.subr.mxu0 0.0
  %306 = vmatpush2.xpose.msra.mxu0 0.0
  %307 = vmatprep.subr.mxu0 0.0
  %308 = vmatpush2.xpose.msra.mxu0 0.0
  %309 = vmatprep.subr.mxu0 0.0
  %310 = vmatpush2.xpose.msra.mxu0 0.0
  %311 = vmatprep.subr.mxu0 0.0
  %312 = vmatpush2.xpose.msra.mxu0 0.0
  %313 = vmatprep.subr.mxu0 0.0
  %314 = vmatpush2.xpose.msra.mxu0 0.0
  %315 = vmatprep.subr.mxu0 0.0
  %316 = vmatpush2.xpose.msra.mxu0 0.0
  %317 = vmatprep.subr.mxu0 0.0
  %318 = vmatpush2.xpose.msra.mxu0 0.0
  %319 = vmatprep.subr.mxu0 0.0
  %320 = vmatpush2.xpose.msra.mxu0 0.0
  %321 = vmatprep.subr.mxu0 0.0
  %322 = vmatpush2.xpose.msra.mxu0 0.0
  %323 = vmatprep.subr.mxu0 0.0
  %324 = vmatpush2.xpose.msra.mxu0 0.0
  %325 = vmatprep.subr.mxu0 0.0
  %326 = vmatpush2.xpose.msra.mxu0 0.0
  %327 = vmatprep.subr.mxu0 0.0
  %328 = vmatpush2.xpose.msra.mxu0 0.0
  %329 = vmatprep.subr.mxu0 0.0
  %330 = vmatpush2.xpose.msra.mxu0 0.0
  %331 = vmatprep.subr.mxu0 0.0
  %332 = vmatpush2.xpose.msra.mxu0 0.0
  %333 = vmatprep.subr.mxu0 0.0
  %334 = vmatpush2.xpose.msra.mxu0 0.0
  %335 = vmatprep.subr.mxu0 0.0
  %336 = vmatpush2.xpose.msra.mxu0 0.0
  %337 = vmatprep.mubr.f32.mxu0 0.0
  %338 = vmatmul.mubr.f32.gmra.mxu0 %v223
  %v339 = vpop.f32.mrf.mxu0
  %v340 = vadd.f32 %v219, %v339
  %v341 = vpop.f32.mrf.mxu0
  %342 = vdwg.mxu0
  %v343 = vrot.slane %v340, 4
  %v344 = vmax.f32 %v340, %v343
  %v345 = vrot.slane %v344, 2
  %v346 = vmax.f32 %v344, %v345
  %v347 = vrot.slane %v346, 1
  %v348 = vmax.f32 %v346, %v347
  %v349 = vsub.f32 %v340, %v348
  %v350 = vmul.f32 %v349, 1.442695
  %v351 = vpow.pop %v350
  %v352 = vrot.slane %v351, 4
  %v353 = vadd.f32 %v351, %v352
  %v354 = vrot.slane %v353, 2
  %v355 = vadd.f32 %v353, %v354
  %v356 = vrot.slane %v355, 1
  %v357 = vadd.f32 %v355, %v356
  %v358 = vrcp.pop %v357
  %v359 = vmul.f32 %v351, %v358
  %360 = vst [vmem:[%s5] sm:$0xff] %v359
  // Predicated region
  $region22: #{mlffn_forward.1} parent=0 // pred_check
    _
  $region23: #{mlffn_forward.1} parent=0 // pred_check_branch
    %362 = sbr.rel (0) target = $region25
  $region24: #{mlffn_forward.1} parent=0 // pred_region
    _
  $region25: #{mlffn_forward.1} parent=0 // pred_fallthru
    _
  // Predicated region
  $region26: #{mlffn_forward.1} parent=0 // pred_check
    _
  $region27: #{mlffn_forward.1} parent=0 // pred_check_branch
    %364 = sbr.rel (0) target = $region29
  $region28: #{mlffn_forward.1} parent=0 // pred_region
    _
  $region29: #{mlffn_forward.1} parent=0 // pred_fallthru
    _

</llo_original>
